<compile_context>
chip_gen: v5e
topology: v5e:2x2
jax: 0.10.0
libtpu: 0.0.40
codegen_flags: <defaults>
</compile_context>

<pallas_src>
import functools
import math

import jax
import jax.numpy as jnp
from jax.experimental import pallas as pl
from jax.experimental.pallas import tpu as pltpu


# ---------------------------------------------------------------------------
# Fused kernel: grouped dilated conv + BN(train) + ReLU [+ 1x1 conv + ReLU]
# ---------------------------------------------------------------------------
def _aspp_fused_kernel(x_ref, wdw_ref, gamma_ref, beta_ref, agg_ref, *rest,
                       k, dil, pad, H, W, eps, inv_count, has_pw):
    # x_ref:     (rows=N*Cout, H*W)   VMEM  row r = batch r//Cout, channel r%Cout
    # wdw_ref:   (k*k, rows, 1)       VMEM  per-row depthwise tap, one slab per tap
    # gamma_ref: (rows, 1)            VMEM  BN gamma tiled over batch
    # beta_ref:  (rows, 1)            VMEM
    # agg_ref:   (rows, rows)         VMEM  A[r,r'] = 1 if same channel
    # [bpw_ref:  (N*Cf, rows)         VMEM] block-diag pointwise matrix (has_pw)
    # o_ref:     (N*Cf, H*W)          VMEM
    if has_pw:
        bpw_ref, o_ref = rest
    else:
        (o_ref,) = rest
        bpw_ref = None

    rows = x_ref.shape[0]
    HW = H * W
    x = x_ref[...]                                      # (rows, HW)

    # Hoisted, channel-independent index helpers (computed once per call).
    if k > 1:
        flat = jax.lax.broadcasted_iota(jnp.int32, (rows, HW), 1)
        if W & (W - 1) == 0:
            col = flat & (W - 1)                        # flat % W, pow2 fast path
        else:
            # flat % W via restoring division (no vector integer div needed)
            col = flat
            m = max(1, (H - 1).bit_length())
            for jj in range(m - 1, -1, -1):
                step = W << jj
                col = jnp.where(col >= step, col - step, col)
    else:
        flat = col = None

    # ---- grouped (depthwise) dilated conv: ONE roll + ONE mask per tap ----
    acc = jnp.zeros((rows, HW), jnp.float32)
    for kh in range(k):
        for kw in range(k):
            dh = kh * dil - pad
            dw = kw * dil - pad
            s = dh * W + dw                             # tap offset, flat coords
            src = x if s == 0 else pltpu.roll(x, (-s) % HW, axis=1)
            conds = []
            if dh < 0:
                conds.append(flat >= -dh * W)           # h + dh >= 0
            if dh > 0:
                conds.append(flat < HW - dh * W)        # h + dh < H
            if dw < 0:
                conds.append(col >= -dw)                # w + dw >= 0
            if dw > 0:
                conds.append(col < W - dw)              # w + dw < W
            if conds:
                valid = functools.reduce(lambda a, b: a & b, conds)
                src = jnp.where(valid, src, 0.0)
            tapw = wdw_ref[kh * k + kw]                 # (rows, 1) sublane bcast
            acc = acc + tapw * src

    # ---- BatchNorm2d (training mode), single pass + folded affine ----
    row_sum = jnp.sum(acc, axis=1, keepdims=True)       # (rows, 1)
    row_sq = jnp.sum(acc * acc, axis=1, keepdims=True)  # (rows, 1)
    A = agg_ref[...]                                    # (rows, rows)
    ch_sum = jnp.dot(A, row_sum, preferred_element_type=jnp.float32)
    ch_sq = jnp.dot(A, row_sq, preferred_element_type=jnp.float32)
    mean = ch_sum * inv_count
    var = ch_sq * inv_count - mean * mean               # biased batch variance
    scale = gamma_ref[...] * jax.lax.rsqrt(var + eps)   # (rows, 1)
    shift = beta_ref[...] - mean * scale
    y = jnp.maximum(acc * scale + shift, 0.0)           # BN affine + ReLU

    # ---- optional 1x1 pointwise conv + ReLU on the MXU ----
    if has_pw:
        out = jnp.dot(bpw_ref[...], y, preferred_element_type=jnp.float32)
        o_ref[...] = jnp.maximum(out, 0.0)
    else:
        o_ref[...] = y


# ---------------------------------------------------------------------------
# Wrapper: only free reshapes around the kernel (no transposes, no jnp.pad,
# no intermediate HBM round trips).
# ---------------------------------------------------------------------------
def aspp_forward(x, w_dw, gamma, beta, w_pw, dilation):
    N, Cin, H, W = x.shape
    Cout = int(w_dw.shape[0])
    mult = Cout // Cin
    if dilation == 1:
        k, pad = 1, 0
    else:
        k, pad = 3, dilation
    HW = H * W
    rows = N * Cout

    # Depthwise-expanded rows: a FREE reshape of NCHW when planes == inplanes
    # (the MFIALane configuration); channel replication only if mult > 1.
    if mult == 1:
        x2 = x.reshape(rows, HW)
    else:
        x2 = jnp.repeat(x, mult, axis=1).reshape(rows, HW)
    x2 = x2.astype(jnp.float32)

    # Per-row depthwise taps, one (rows,1) slab per tap position.
    wt_rows = jnp.tile(w_dw.reshape(Cout, k * k).astype(jnp.float32), (N, 1))
    wt_taps = jnp.transpose(wt_rows, (1, 0))[:, :, None]        # (k*k, rows, 1)
    gamma_rows = jnp.tile(gamma.astype(jnp.float32), N).reshape(rows, 1)
    beta_rows = jnp.tile(beta.astype(jnp.float32), N).reshape(rows, 1)

    # Same-channel aggregation matrix: A[r, r'] = 1 iff r % Cout == r' % Cout.
    ridx = jnp.arange(rows, dtype=jnp.int32)
    agg = (ridx[:, None] % Cout == ridx[None, :] % Cout).astype(jnp.float32)

    has_pw = w_pw is not None
    if has_pw:
        Cf, Cpw_in = int(w_pw.shape[0]), int(w_pw.shape[1])
        assert Cpw_in == Cout, "pointwise in-channels must equal atrous out-channels"
        # Block-diagonal (N*Cf, N*Cout): out row n*Cf+p mixes in rows n*Cout+o.
        bpw = jnp.kron(jnp.eye(N, dtype=jnp.float32),
                       w_pw.reshape(Cf, Cout).astype(jnp.float32))
    else:
        Cf = Cout

    kernel = functools.partial(
        _aspp_fused_kernel, k=k, dil=dilation, pad=pad, H=H, W=W, eps=1e-3,
        inv_count=1.0 / float(N * H * W), has_pw=has_pw)

    vmem = pl.BlockSpec(memory_space=pltpu.MemorySpace.VMEM)
    in_specs = [vmem] * (6 if has_pw else 5)
    args = (x2, wt_taps, gamma_rows, beta_rows, agg) + ((bpw,) if has_pw else ())

    out_rows = N * Cf
    flops = (rows * HW * 2 * k * k + 8 * rows * HW
             + (2 * out_rows * rows * HW if has_pw else 0))
    bytes_accessed = 4 * (x2.size + out_rows * HW + rows * (k * k + 2)
                          + rows * rows + (out_rows * rows if has_pw else 0))
    vmem_limit = int(min(64 * 2**20, max(8 * 2**20, 8 * 4 * (x2.size + out_rows * HW))))

    out = pl.pallas_call(
        kernel,
        out_shape=jax.ShapeDtypeStruct((out_rows, HW), jnp.float32),
        in_specs=in_specs,
        out_specs=vmem,
        compiler_params=pltpu.CompilerParams(vmem_limit_bytes=vmem_limit),
        cost_estimate=pl.CostEstimate(flops=flops, transcendentals=rows,
                                      bytes_accessed=bytes_accessed),
    )(*args)

    # Back to NCHW with a free reshape (no transpose).
    return out.reshape(N, Cf, H, W)


# ---------------------------------------------------------------------------
# Pure-JAX reference (for correctness check)
# ---------------------------------------------------------------------------
def aspp_ref(x, w_dw, gamma, beta, w_pw, dilation):
    if dilation == 1:
        k, pad = 1, 0
    else:
        k, pad = 3, dilation
    y = jax.lax.conv_general_dilated(
        x, w_dw, window_strides=(1, 1), padding=[(pad, pad), (pad, pad)],
        rhs_dilation=(dilation, dilation),
        dimension_numbers=("NCHW", "OIHW", "NCHW"),
        feature_group_count=x.shape[1])
    mean = y.mean(axis=(0, 2, 3), keepdims=True)
    var = y.var(axis=(0, 2, 3), keepdims=True)
    y = (y - mean) / jnp.sqrt(var + 1e-3) * gamma[None, :, None, None] + beta[None, :, None, None]
    y = jnp.maximum(y, 0.0)
    if w_pw is not None:
        y = jax.lax.conv_general_dilated(
            y, w_pw, (1, 1), "VALID", dimension_numbers=("NCHW", "OIHW", "NCHW"))
        y = jnp.maximum(y, 0.0)
    return y


if __name__ == "__main__":
    # inplanes=planes=4 (as required by the module's pointwise branch),
    # input NCHW (2, 4, 16, 16); H*W = 256 keeps the output lane-dense.
    inplanes, planes = 4, 4
    N, H, W = 2, 16, 16

    key = jax.random.PRNGKey(0)
    kx, kw1, kw2, kw3 = jax.random.split(key, 4)
    x = jax.random.normal(kx, (N, inplanes, H, W), dtype=jnp.float32)

    # Deterministic params mirroring _init_weight:
    #   conv weight ~ N(0, sqrt(2 / (kh*kw*out_channels))), BN gamma=1, beta=0.
    gamma = jnp.ones((planes,), jnp.float32)
    beta = jnp.zeros((planes,), jnp.float32)

    # Config 1: dilation=2 -> 3x3 dilated grouped conv (pad=2) + pointwise.
    dilation, k = 2, 3
    std_dw = math.sqrt(2.0 / (k * k * planes))
    w_dw = std_dw * jax.random.normal(kw1, (planes, 1, k, k), dtype=jnp.float32)
    std_pw = math.sqrt(2.0 / (1 * 1 * planes))
    w_pw = std_pw * jax.random.normal(kw2, (planes, inplanes, 1, 1), dtype=jnp.float32)

    out = jax.block_until_ready(aspp_forward(x, w_dw, gamma, beta, w_pw, dilation))
    ref = aspp_ref(x, w_dw, gamma, beta, w_pw, dilation)
    assert out.shape == ref.shape == (N, planes, H, W)
    assert jnp.allclose(out, ref, rtol=1e-3, atol=1e-3), "mismatch vs JAX reference (dilation=2)"

    # Config 2: dilation=1 -> 1x1 grouped conv, no pointwise.
    w_dw1 = math.sqrt(2.0 / planes) * jax.random.normal(
        kw3, (planes, 1, 1, 1), dtype=jnp.float32)
    out1 = jax.block_until_ready(aspp_forward(x, w_dw1, gamma, beta, None, 1))
    ref1 = aspp_ref(x, w_dw1, gamma, beta, None, 1)
    assert jnp.allclose(out1, ref1, rtol=1e-3, atol=1e-3), "mismatch vs JAX reference (dilation=1)"

    print("KERNEL_OK")
</pallas_src>

<mosaic_0001>
module attributes {stable_mosaic.version = 11 : i64} {
  func.func @_aspp_fused_kernel(%arg0: memref<8x256xf32, #tpu.memory_space<vmem>>, %arg1: memref<9x8x1xf32, #tpu.memory_space<vmem>>, %arg2: memref<8x1xf32, #tpu.memory_space<vmem>>, %arg3: memref<8x1xf32, #tpu.memory_space<vmem>>, %arg4: memref<8x8xf32, #tpu.memory_space<vmem>>, %arg5: memref<8x8xf32, #tpu.memory_space<vmem>>, %arg6: memref<8x256xf32, #tpu.memory_space<vmem>>) attributes {dimension_semantics = [], scalar_prefetch = 0 : i64, scratch_operands = 0 : i64, tpu.core_type = #tpu.core_type<tc>} {
    %c0 = arith.constant 0 : index
    %c0_0 = arith.constant 0 : index
    %0 = vector.load %arg0[%c0, %c0_0] : memref<8x256xf32, #tpu.memory_space<vmem>>, vector<8x256xf32>
    %1 = tpu.iota {dimensions = array<i32: 1>} : vector<8x256xi32>
    %c15_i32 = arith.constant 15 : i32
    %2 = vector.broadcast %c15_i32 : i32 to vector<8x256xi32>
    %3 = arith.andi %1, %2 : vector<8x256xi32>
    %cst = arith.constant 0.000000e+00 : f32
    %4 = vector.broadcast %cst : f32 to vector<8x256xf32>
    %c34_i32 = arith.constant 34 : i32
    %5 = tpu.dynamic_rotate %0 by %c34_i32 dim 1 : vector<8x256xf32>, i32 -> vector<8x256xf32>
    %c32_i32 = arith.constant 32 : i32
    %6 = vector.broadcast %c32_i32 : i32 to vector<8x256xi32>
    %7 = arith.cmpi sge, %1, %6 : vector<8x256xi32>
    %c2_i32 = arith.constant 2 : i32
    %8 = vector.broadcast %c2_i32 : i32 to vector<8x256xi32>
    %9 = arith.cmpi sge, %3, %8 : vector<8x256xi32>
    %10 = arith.andi %7, %9 : vector<8x256xi1>
    %cst_1 = arith.constant 0.000000e+00 : f32
    %11 = vector.broadcast %cst_1 : f32 to vector<8x256xf32>
    %12 = arith.select %10, %5, %11 : vector<8x256xi1>, vector<8x256xf32>
    %c0_2 = arith.constant 0 : index
    %c0_3 = arith.constant 0 : index
    %c0_4 = arith.constant 0 : index
    %13 = vector.load %arg1[%c0_2, %c0_3, %c0_4] : memref<9x8x1xf32, #tpu.memory_space<vmem>>, vector<1x8x1xf32>
    %14 = vector.shape_cast %13 : vector<1x8x1xf32> to vector<8x1xf32>
    %15 = vector.broadcast %14 : vector<8x1xf32> to vector<8x256xf32>
    %16 = arith.mulf %15, %12 : vector<8x256xf32>
    %17 = arith.addf %4, %16 : vector<8x256xf32>
    %c32_i32_5 = arith.constant 32 : i32
    %18 = tpu.dynamic_rotate %0 by %c32_i32_5 dim 1 : vector<8x256xf32>, i32 -> vector<8x256xf32>
    %c32_i32_6 = arith.constant 32 : i32
    %19 = vector.broadcast %c32_i32_6 : i32 to vector<8x256xi32>
    %20 = arith.cmpi sge, %1, %19 : vector<8x256xi32>
    %cst_7 = arith.constant 0.000000e+00 : f32
    %21 = vector.broadcast %cst_7 : f32 to vector<8x256xf32>
    %22 = arith.select %20, %18, %21 : vector<8x256xi1>, vector<8x256xf32>
    %c1 = arith.constant 1 : index
    %c0_8 = arith.constant 0 : index
    %c0_9 = arith.constant 0 : index
    %23 = vector.load %arg1[%c1, %c0_8, %c0_9] : memref<9x8x1xf32, #tpu.memory_space<vmem>>, vector<1x8x1xf32>
    %24 = vector.shape_cast %23 : vector<1x8x1xf32> to vector<8x1xf32>
    %25 = vector.broadcast %24 : vector<8x1xf32> to vector<8x256xf32>
    %26 = arith.mulf %25, %22 : vector<8x256xf32>
    %27 = arith.addf %17, %26 : vector<8x256xf32>
    %c30_i32 = arith.constant 30 : i32
    %28 = tpu.dynamic_rotate %0 by %c30_i32 dim 1 : vector<8x256xf32>, i32 -> vector<8x256xf32>
    %c32_i32_10 = arith.constant 32 : i32
    %29 = vector.broadcast %c32_i32_10 : i32 to vector<8x256xi32>
    %30 = arith.cmpi sge, %1, %29 : vector<8x256xi32>
    %c14_i32 = arith.constant 14 : i32
    %31 = vector.broadcast %c14_i32 : i32 to vector<8x256xi32>
    %32 = arith.cmpi slt, %3, %31 : vector<8x256xi32>
    %33 = arith.andi %30, %32 : vector<8x256xi1>
    %cst_11 = arith.constant 0.000000e+00 : f32
    %34 = vector.broadcast %cst_11 : f32 to vector<8x256xf32>
    %35 = arith.select %33, %28, %34 : vector<8x256xi1>, vector<8x256xf32>
    %c2 = arith.constant 2 : index
    %c0_12 = arith.constant 0 : index
    %c0_13 = arith.constant 0 : index
    %36 = vector.load %arg1[%c2, %c0_12, %c0_13] : memref<9x8x1xf32, #tpu.memory_space<vmem>>, vector<1x8x1xf32>
    %37 = vector.shape_cast %36 : vector<1x8x1xf32> to vector<8x1xf32>
    %38 = vector.broadcast %37 : vector<8x1xf32> to vector<8x256xf32>
    %39 = arith.mulf %38, %35 : vector<8x256xf32>
    %40 = arith.addf %27, %39 : vector<8x256xf32>
    %c2_i32_14 = arith.constant 2 : i32
    %41 = tpu.dynamic_rotate %0 by %c2_i32_14 dim 1 : vector<8x256xf32>, i32 -> vector<8x256xf32>
    %c2_i32_15 = arith.constant 2 : i32
    %42 = vector.broadcast %c2_i32_15 : i32 to vector<8x256xi32>
    %43 = arith.cmpi sge, %3, %42 : vector<8x256xi32>
    %cst_16 = arith.constant 0.000000e+00 : f32
    %44 = vector.broadcast %cst_16 : f32 to vector<8x256xf32>
    %45 = arith.select %43, %41, %44 : vector<8x256xi1>, vector<8x256xf32>
    %c3 = arith.constant 3 : index
    %c0_17 = arith.constant 0 : index
    %c0_18 = arith.constant 0 : index
    %46 = vector.load %arg1[%c3, %c0_17, %c0_18] : memref<9x8x1xf32, #tpu.memory_space<vmem>>, vector<1x8x1xf32>
    %47 = vector.shape_cast %46 : vector<1x8x1xf32> to vector<8x1xf32>
    %48 = vector.broadcast %47 : vector<8x1xf32> to vector<8x256xf32>
    %49 = arith.mulf %48, %45 : vector<8x256xf32>
    %50 = arith.addf %40, %49 : vector<8x256xf32>
    %c4 = arith.constant 4 : index
    %c0_19 = arith.constant 0 : index
    %c0_20 = arith.constant 0 : index
    %51 = vector.load %arg1[%c4, %c0_19, %c0_20] : memref<9x8x1xf32, #tpu.memory_space<vmem>>, vector<1x8x1xf32>
    %52 = vector.shape_cast %51 : vector<1x8x1xf32> to vector<8x1xf32>
    %53 = vector.broadcast %52 : vector<8x1xf32> to vector<8x256xf32>
    %54 = arith.mulf %53, %0 : vector<8x256xf32>
    %55 = arith.addf %50, %54 : vector<8x256xf32>
    %c254_i32 = arith.constant 254 : i32
    %56 = tpu.dynamic_rotate %0 by %c254_i32 dim 1 : vector<8x256xf32>, i32 -> vector<8x256xf32>
    %c14_i32_21 = arith.constant 14 : i32
    %57 = vector.broadcast %c14_i32_21 : i32 to vector<8x256xi32>
    %58 = arith.cmpi slt, %3, %57 : vector<8x256xi32>
    %cst_22 = arith.constant 0.000000e+00 : f32
    %59 = vector.broadcast %cst_22 : f32 to vector<8x256xf32>
    %60 = arith.select %58, %56, %59 : vector<8x256xi1>, vector<8x256xf32>
    %c5 = arith.constant 5 : index
    %c0_23 = arith.constant 0 : index
    %c0_24 = arith.constant 0 : index
    %61 = vector.load %arg1[%c5, %c0_23, %c0_24] : memref<9x8x1xf32, #tpu.memory_space<vmem>>, vector<1x8x1xf32>
    %62 = vector.shape_cast %61 : vector<1x8x1xf32> to vector<8x1xf32>
    %63 = vector.broadcast %62 : vector<8x1xf32> to vector<8x256xf32>
    %64 = arith.mulf %63, %60 : vector<8x256xf32>
    %65 = arith.addf %55, %64 : vector<8x256xf32>
    %c226_i32 = arith.constant 226 : i32
    %66 = tpu.dynamic_rotate %0 by %c226_i32 dim 1 : vector<8x256xf32>, i32 -> vector<8x256xf32>
    %c224_i32 = arith.constant 224 : i32
    %67 = vector.broadcast %c224_i32 : i32 to vector<8x256xi32>
    %68 = arith.cmpi slt, %1, %67 : vector<8x256xi32>
    %c2_i32_25 = arith.constant 2 : i32
    %69 = vector.broadcast %c2_i32_25 : i32 to vector<8x256xi32>
    %70 = arith.cmpi sge, %3, %69 : vector<8x256xi32>
    %71 = arith.andi %68, %70 : vector<8x256xi1>
    %cst_26 = arith.constant 0.000000e+00 : f32
    %72 = vector.broadcast %cst_26 : f32 to vector<8x256xf32>
    %73 = arith.select %71, %66, %72 : vector<8x256xi1>, vector<8x256xf32>
    %c6 = arith.constant 6 : index
    %c0_27 = arith.constant 0 : index
    %c0_28 = arith.constant 0 : index
    %74 = vector.load %arg1[%c6, %c0_27, %c0_28] : memref<9x8x1xf32, #tpu.memory_space<vmem>>, vector<1x8x1xf32>
    %75 = vector.shape_cast %74 : vector<1x8x1xf32> to vector<8x1xf32>
    %76 = vector.broadcast %75 : vector<8x1xf32> to vector<8x256xf32>
    %77 = arith.mulf %76, %73 : vector<8x256xf32>
    %78 = arith.addf %65, %77 : vector<8x256xf32>
    %c224_i32_29 = arith.constant 224 : i32
    %79 = tpu.dynamic_rotate %0 by %c224_i32_29 dim 1 : vector<8x256xf32>, i32 -> vector<8x256xf32>
    %c224_i32_30 = arith.constant 224 : i32
    %80 = vector.broadcast %c224_i32_30 : i32 to vector<8x256xi32>
    %81 = arith.cmpi slt, %1, %80 : vector<8x256xi32>
    %cst_31 = arith.constant 0.000000e+00 : f32
    %82 = vector.broadcast %cst_31 : f32 to vector<8x256xf32>
    %83 = arith.select %81, %79, %82 : vector<8x256xi1>, vector<8x256xf32>
    %c7 = arith.constant 7 : index
    %c0_32 = arith.constant 0 : index
    %c0_33 = arith.constant 0 : index
    %84 = vector.load %arg1[%c7, %c0_32, %c0_33] : memref<9x8x1xf32, #tpu.memory_space<vmem>>, vector<1x8x1xf32>
    %85 = vector.shape_cast %84 : vector<1x8x1xf32> to vector<8x1xf32>
    %86 = vector.broadcast %85 : vector<8x1xf32> to vector<8x256xf32>
    %87 = arith.mulf %86, %83 : vector<8x256xf32>
    %88 = arith.addf %78, %87 : vector<8x256xf32>
    %c222_i32 = arith.constant 222 : i32
    %89 = tpu.dynamic_rotate %0 by %c222_i32 dim 1 : vector<8x256xf32>, i32 -> vector<8x256xf32>
    %c224_i32_34 = arith.constant 224 : i32
    %90 = vector.broadcast %c224_i32_34 : i32 to vector<8x256xi32>
    %91 = arith.cmpi slt, %1, %90 : vector<8x256xi32>
    %c14_i32_35 = arith.constant 14 : i32
    %92 = vector.broadcast %c14_i32_35 : i32 to vector<8x256xi32>
    %93 = arith.cmpi slt, %3, %92 : vector<8x256xi32>
    %94 = arith.andi %91, %93 : vector<8x256xi1>
    %cst_36 = arith.constant 0.000000e+00 : f32
    %95 = vector.broadcast %cst_36 : f32 to vector<8x256xf32>
    %96 = arith.select %94, %89, %95 : vector<8x256xi1>, vector<8x256xf32>
    %c8 = arith.constant 8 : index
    %c0_37 = arith.constant 0 : index
    %c0_38 = arith.constant 0 : index
    %97 = vector.load %arg1[%c8, %c0_37, %c0_38] : memref<9x8x1xf32, #tpu.memory_space<vmem>>, vector<1x8x1xf32>
    %98 = vector.shape_cast %97 : vector<1x8x1xf32> to vector<8x1xf32>
    %99 = vector.broadcast %98 : vector<8x1xf32> to vector<8x256xf32>
    %100 = arith.mulf %99, %96 : vector<8x256xf32>
    %101 = arith.addf %88, %100 : vector<8x256xf32>
    %cst_39 = arith.constant dense<0.000000e+00> : vector<8xf32>
    %102 = vector.multi_reduction <add>, %101, %cst_39 [1] : vector<8x256xf32> to vector<8xf32>
    %103 = vector.shape_cast %102 : vector<8xf32> to vector<8x1xf32>
    %104 = arith.mulf %101, %101 : vector<8x256xf32>
    %cst_40 = arith.constant dense<0.000000e+00> : vector<8xf32>
    %105 = vector.multi_reduction <add>, %104, %cst_40 [1] : vector<8x256xf32> to vector<8xf32>
    %106 = vector.shape_cast %105 : vector<8xf32> to vector<8x1xf32>
    %c0_41 = arith.constant 0 : index
    %c0_42 = arith.constant 0 : index
    %107 = vector.load %arg4[%c0_41, %c0_42] : memref<8x8xf32, #tpu.memory_space<vmem>>, vector<8x8xf32>
    %cst_43 = arith.constant dense<0.000000e+00> : vector<8x1xf32>
    %108 = tpu.matmul %107, %103, %cst_43 {dimension_numbers = #tpu.dot_dimension_numbers<[1], [0], [0], [1], [0, 0, 1, 1], [], []>} : vector<8x8xf32>, vector<8x1xf32>, vector<8x1xf32> -> vector<8x1xf32>
    %cst_44 = arith.constant dense<0.000000e+00> : vector<8x1xf32>
    %109 = tpu.matmul %107, %106, %cst_44 {dimension_numbers = #tpu.dot_dimension_numbers<[1], [0], [0], [1], [0, 0, 1, 1], [], []>} : vector<8x8xf32>, vector<8x1xf32>, vector<8x1xf32> -> vector<8x1xf32>
    %cst_45 = arith.constant 0.001953125 : f32
    %110 = vector.broadcast %cst_45 : f32 to vector<8x1xf32>
    %111 = arith.mulf %108, %110 : vector<8x1xf32>
    %cst_46 = arith.constant 0.001953125 : f32
    %112 = vector.broadcast %cst_46 : f32 to vector<8x1xf32>
    %113 = arith.mulf %109, %112 : vector<8x1xf32>
    %114 = arith.mulf %111, %111 : vector<8x1xf32>
    %115 = arith.subf %113, %114 : vector<8x1xf32>
    %c0_47 = arith.constant 0 : index
    %c0_48 = arith.constant 0 : index
    %116 = vector.load %arg2[%c0_47, %c0_48] : memref<8x1xf32, #tpu.memory_space<vmem>>, vector<8x1xf32>
    %cst_49 = arith.constant 1.000000e-03 : f32
    %117 = vector.broadcast %cst_49 : f32 to vector<8x1xf32>
    %118 = arith.addf %115, %117 : vector<8x1xf32>
    %119 = math.rsqrt %118 : vector<8x1xf32>
    %120 = arith.mulf %116, %119 : vector<8x1xf32>
    %c0_50 = arith.constant 0 : index
    %c0_51 = arith.constant 0 : index
    %121 = vector.load %arg3[%c0_50, %c0_51] : memref<8x1xf32, #tpu.memory_space<vmem>>, vector<8x1xf32>
    %122 = arith.mulf %111, %120 : vector<8x1xf32>
    %123 = arith.subf %121, %122 : vector<8x1xf32>
    %124 = vector.broadcast %120 : vector<8x1xf32> to vector<8x256xf32>
    %125 = arith.mulf %101, %124 : vector<8x256xf32>
    %126 = vector.broadcast %123 : vector<8x1xf32> to vector<8x256xf32>
    %127 = arith.addf %125, %126 : vector<8x256xf32>
    %cst_52 = arith.constant 0.000000e+00 : f32
    %128 = vector.broadcast %cst_52 : f32 to vector<8x256xf32>
    %129 = arith.maximumf %127, %128 : vector<8x256xf32>
    %c0_53 = arith.constant 0 : index
    %c0_54 = arith.constant 0 : index
    %130 = vector.load %arg5[%c0_53, %c0_54] : memref<8x8xf32, #tpu.memory_space<vmem>>, vector<8x8xf32>
    %cst_55 = arith.constant dense<0.000000e+00> : vector<8x256xf32>
    %131 = tpu.matmul %130, %129, %cst_55 {dimension_numbers = #tpu.dot_dimension_numbers<[1], [0], [0], [1], [0, 0, 1, 1], [], []>} : vector<8x8xf32>, vector<8x256xf32>, vector<8x256xf32> -> vector<8x256xf32>
    %cst_56 = arith.constant 0.000000e+00 : f32
    %132 = vector.broadcast %cst_56 : f32 to vector<8x256xf32>
    %133 = arith.maximumf %131, %132 : vector<8x256xf32>
    %c0_57 = arith.constant 0 : index
    %c0_58 = arith.constant 0 : index
    %134 = vector.load %arg6[%c0_57, %c0_58] : memref<8x256xf32, #tpu.memory_space<vmem>>, vector<8x256xf32>
    tpu.vector_store %arg6[%c0_57, %c0_58], %133 {strides = array<i32>} : memref<8x256xf32, #tpu.memory_space<vmem>>, vector<8x256xf32>,
    return
  }
}

</mosaic_0001>

<llo_original>
// kernel: tpu_custom_call.1
$region0: #{tpu_custom_call.1}
  #allocation0 [shape = 'u32[]', space=smem, size = 0x4, offset = 0x4, fixed_abs, tag = 'smem constant byte address 0x4 - core index']
  #allocation1 [shape = 'u32[72,128]{1,0:T(1,128)}', space=vmem, size = 0x9000, scoped, tag = 'internal scratch']
  %s0 = inlined_call_operand.vmem [shape: f32[8,256], index: 0, kind: input, shape index: {}]
  %s1 = inlined_call_operand.vmem [shape: f32[9,8,1], index: 1, kind: input, shape index: {}]
  %s2 = inlined_call_operand.vmem [shape: f32[8,1], index: 2, kind: input, shape index: {}]
  %s3 = inlined_call_operand.vmem [shape: f32[8,1], index: 3, kind: input, shape index: {}]
  %s4 = inlined_call_operand.vmem [shape: f32[8,8], index: 4, kind: input, shape index: {}]
  %s5 = inlined_call_operand.vmem [shape: f32[8,8], index: 5, kind: input, shape index: {}]
  %s6 = inlined_call_operand.hbm [shape: f32[8,256], index: 6, kind: output, shape index: {}]
  %s7 = sld [smem:[#allocation0]]
  $region34: #{tpu_custom_call.1} parent=0
    _
  %s9 = ssub.s32 1, %s7
  %s10 = scalar_select 0, %s9, %s7
  $region1: #{tpu_custom_call.1} parent=0
    #allocation2 [shape = 'u8[8192]{0}', space=vmem, size = 0x2000, scoped, tag = 'output window, operand 0, single buffered']
    #allocation3 [shape = 's32[1]{0}', space=sflag, size = 0x4, scoped, tag = 'scoped memory for tpu_custom_call.1']
    %11 = vsyncpa [#allocation3], 0
    // Predicated region
    $region2: #{tpu_custom_call.1} parent=1 // pred_check
      _
    $region3: #{tpu_custom_call.1} parent=1 // pred_check_branch
      %13 = sbr.rel (0) target = $region5
    $region4: #{tpu_custom_call.1} parent=1 // pred_region
      _
    $region5: #{tpu_custom_call.1} parent=1 // pred_fallthru
      _
    // Predicated region
    $region6: #{tpu_custom_call.1} parent=1 // pred_check
      _
    $region7: #{tpu_custom_call.1} parent=1 // pred_check_branch
      %15 = sbr.rel (0) target = $region9
    $region8: #{tpu_custom_call.1} parent=1 // pred_region
      _
    $region9: #{tpu_custom_call.1} parent=1 // pred_fallthru
      _
    // Predicated region
    $region10: #{tpu_custom_call.1} parent=1 // pred_check
      _
    $region11: #{tpu_custom_call.1} parent=1 // pred_check_branch
      %17 = sbr.rel (0) target = $region13
    $region12: #{tpu_custom_call.1} parent=1 // pred_region
      _
    $region13: #{tpu_custom_call.1} parent=1 // pred_fallthru
      _
    // Predicated region
    $region14: #{tpu_custom_call.1} parent=1 // pred_check
      _
    $region15: #{tpu_custom_call.1} parent=1 // pred_check_branch
      %19 = sbr.rel (0) target = $region17
    $region16: #{tpu_custom_call.1} parent=1 // pred_region
      _
    $region17: #{tpu_custom_call.1} parent=1 // pred_fallthru
      _
    // Predicated region
    $region18: #{tpu_custom_call.1} parent=1 // pred_check
      _
    $region19: #{tpu_custom_call.1} parent=1 // pred_check_branch
      %21 = sbr.rel (0) target = $region21
    $region20: #{tpu_custom_call.1} parent=1 // pred_region
      _
    $region21: #{tpu_custom_call.1} parent=1 // pred_fallthru
      _
    // Predicated region
    $region22: #{tpu_custom_call.1} parent=1 // pred_check
      _
    $region23: #{tpu_custom_call.1} parent=1 // pred_check_branch
      %23 = sbr.rel (0) target = $region25
    $region24: #{tpu_custom_call.1} parent=1 // pred_region
      _
    $region25: #{tpu_custom_call.1} parent=1 // pred_fallthru
      _
    %v24 = vld [vmem:[%s0] sm:$0xff]
    %v25 = vld [vmem:[%s0 + $0x8] sm:$0xff]
    %v26 = vlaneseq
    %v27 = vand.u32 %v26, 127
    %v28 = vadd.s32 %v27, 128
    %v29 = vand.u32 %v27, 15
    %v30 = vand.u32 %v28, 15
    %31 = vrot.lane.b32.xlu0 %v24, 34
    %v32 = vpop.permute.xlu0 %31
    %33 = vrot.lane.b32.xlu0 %v25, 34
    %v34 = vpop.permute.xlu0 %33
    %vm35 = vcmp.lt.s32.totalorder %v27, 34
    %v36 = vsel %vm35, %v32, %v34
    %v37 = vsel %vm35, %v34, %v32
    %vm38 = vcmp.ge.s32.totalorder %v27, 32
    %vm39 = vcmp.ge.s32.totalorder %v28, 32
    %vm40 = vcmp.ge.s32.totalorder %v29, 2
    %vm41 = vcmp.ge.s32.totalorder %v30, 2
    %vm42 = vmand %vm38, %vm40
    %vm43 = vmand %vm39, %vm41
    %v44 = vsel %vm42, %v37, 0.0
    %v45 = vsel %vm43, %v36, 0.0
    %v46 = vld [vmem:[%s1] sm:$0xff]
    %48 = vset.pattern.permute.xlu0 0
    %49 = vperm.xlu0 %48, %v46
    %v50 = vpop.permute.xlu0 %49
    %v52 = vmul.f32 %v50, %v44
    %v53 = vmul.f32 %v50, %v45
    %v54 = vadd.f32 %v52, 0.0
    %v55 = vadd.f32 %v53, 0.0
    %56 = vrot.lane.b32.xlu0 %v24, 32
    %v57 = vpop.permute.xlu0 %56
    %58 = vrot.lane.b32.xlu0 %v25, 32
    %v59 = vpop.permute.xlu0 %58
    %vm60 = vcmp.lt.s32.totalorder %v27, 32
    %v61 = vsel %vm60, %v57, %v59
    %v62 = vsel %vm60, %v59, %v57
    %v63 = vsel %vm38, %v62, 0.0
    %v64 = vsel %vm39, %v61, 0.0
    %s65 = scalar_lea.vmem %s1, 8
    %v66 = vld [vmem:[%s65] sm:$0xff]
    %68 = vset.pattern.permute.xlu0 0
    %69 = vperm.xlu0 %68, %v66
    %v70 = vpop.permute.xlu0 %69
    %v72 = vmul.f32 %v70, %v63
    %v73 = vmul.f32 %v70, %v64
    %v74 = vadd.f32 %v54, %v72
    %v75 = vadd.f32 %v55, %v73
    %76 = vrot.lane.b32.xlu0 %v24, 30
    %v77 = vpop.permute.xlu0 %76
    %78 = vrot.lane.b32.xlu0 %v25, 30
    %v79 = vpop.permute.xlu0 %78
    %vm80 = vcmp.lt.s32.totalorder %v27, 30
    %v81 = vsel %vm80, %v77, %v79
    %v82 = vsel %vm80, %v79, %v77
    %vm83 = vcmp.lt.s32.totalorder %v29, 14
    %vm84 = vcmp.lt.s32.totalorder %v30, 14
    %vm85 = vmand %vm38, %vm83
    %vm86 = vmand %vm39, %vm84
    %v87 = vsel %vm85, %v82, 0.0
    %v88 = vsel %vm86, %v81, 0.0
    %s89 = scalar_lea.vmem %s1, 16
    %v90 = vld [vmem:[%s89] sm:$0xff]
    %92 = vset.pattern.permute.xlu0 0
    %93 = vperm.xlu0 %92, %v90
    %v94 = vpop.permute.xlu0 %93
    %v96 = vmul.f32 %v94, %v87
    %v97 = vmul.f32 %v94, %v88
    %v98 = vadd.f32 %v74, %v96
    %v99 = vadd.f32 %v75, %v97
    %100 = vrot.lane.b32.xlu0 %v24, 2
    %v101 = vpop.permute.xlu0 %100
    %102 = vrot.lane.b32.xlu0 %v25, 2
    %v103 = vpop.permute.xlu0 %102
    %vm104 = vcmp.lt.s32.totalorder %v27, 2
    %v105 = vsel %vm104, %v101, %v103
    %v106 = vsel %vm104, %v103, %v101
    %v107 = vsel %vm40, %v106, 0.0
    %v108 = vsel %vm41, %v105, 0.0
    %s109 = scalar_lea.vmem %s1, 24
    %v110 = vld [vmem:[%s109] sm:$0xff]
    %112 = vset.pattern.permute.xlu0 0
    %113 = vperm.xlu0 %112, %v110
    %v114 = vpop.permute.xlu0 %113
    %v116 = vmul.f32 %v114, %v107
    %v117 = vmul.f32 %v114, %v108
    %v118 = vadd.f32 %v98, %v116
    %v119 = vadd.f32 %v99, %v117
    %s120 = scalar_lea.vmem %s1, 32
    %v121 = vld [vmem:[%s120] sm:$0xff]
    %123 = vset.pattern.permute.xlu0 0
    %124 = vperm.xlu0 %123, %v121
    %v125 = vpop.permute.xlu0 %124
    %v127 = vmul.f32 %v125, %v24
    %v128 = vmul.f32 %v125, %v25
    %v129 = vadd.f32 %v118, %v127
    %v130 = vadd.f32 %v119, %v128
    %131 = vrot.lane.b32.xlu0 %v24, 126
    %v132 = vpop.permute.xlu0 %131
    %133 = vrot.lane.b32.xlu0 %v25, 126
    %v134 = vpop.permute.xlu0 %133
    %vm135 = vcmp.lt.s32.totalorder %v27, 126
    %v136 = vsel %vm135, %v132, %v134
    %v137 = vsel %vm135, %v134, %v132
    %v138 = vsel %vm83, %v136, 0.0
    %v139 = vsel %vm84, %v137, 0.0
    %s140 = scalar_lea.vmem %s1, 40
    %v141 = vld [vmem:[%s140] sm:$0xff]
    %143 = vset.pattern.permute.xlu0 0
    %144 = vperm.xlu0 %143, %v141
    %v145 = vpop.permute.xlu0 %144
    %v147 = vmul.f32 %v145, %v138
    %v148 = vmul.f32 %v145, %v139
    %v149 = vadd.f32 %v129, %v147
    %v150 = vadd.f32 %v130, %v148
    %151 = vrot.lane.b32.xlu0 %v24, 98
    %v152 = vpop.permute.xlu0 %151
    %153 = vrot.lane.b32.xlu0 %v25, 98
    %v154 = vpop.permute.xlu0 %153
    %vm155 = vcmp.lt.s32.totalorder %v27, 98
    %v156 = vsel %vm155, %v152, %v154
    %v157 = vsel %vm155, %v154, %v152
    %vm158 = vcmp.lt.s32.totalorder %v27, 224
    %vm159 = vcmp.lt.s32.totalorder %v28, 224
    %vm160 = vmand %vm158, %vm40
    %vm161 = vmand %vm159, %vm41
    %v162 = vsel %vm160, %v156, 0.0
    %v163 = vsel %vm161, %v157, 0.0
    %s164 = scalar_lea.vmem %s1, 48
    %v165 = vld [vmem:[%s164] sm:$0xff]
    %167 = vset.pattern.permute.xlu0 0
    %168 = vperm.xlu0 %167, %v165
    %v169 = vpop.permute.xlu0 %168
    %v171 = vmul.f32 %v169, %v162
    %v172 = vmul.f32 %v169, %v163
    %v173 = vadd.f32 %v149, %v171
    %v174 = vadd.f32 %v150, %v172
    %175 = vrot.lane.b32.xlu0 %v24, 96
    %v176 = vpop.permute.xlu0 %175
    %177 = vrot.lane.b32.xlu0 %v25, 96
    %v178 = vpop.permute.xlu0 %177
    %vm179 = vcmp.lt.s32.totalorder %v27, 96
    %v180 = vsel %vm179, %v176, %v178
    %v181 = vsel %vm179, %v178, %v176
    %v182 = vsel %vm158, %v180, 0.0
    %v183 = vsel %vm159, %v181, 0.0
    %s184 = scalar_lea.vmem %s1, 56
    %v185 = vld [vmem:[%s184] sm:$0xff]
    %187 = vset.pattern.permute.xlu0 0
    %188 = vperm.xlu0 %187, %v185
    %v189 = vpop.permute.xlu0 %188
    %v191 = vmul.f32 %v189, %v182
    %v192 = vmul.f32 %v189, %v183
    %v193 = vadd.f32 %v173, %v191
    %v194 = vadd.f32 %v174, %v192
    %195 = vrot.lane.b32.xlu0 %v24, 94
    %v196 = vpop.permute.xlu0 %195
    %197 = vrot.lane.b32.xlu0 %v25, 94
    %v198 = vpop.permute.xlu0 %197
    %vm199 = vcmp.lt.s32.totalorder %v27, 94
    %v200 = vsel %vm199, %v196, %v198
    %v201 = vsel %vm199, %v198, %v196
    %vm202 = vmand %vm158, %vm83
    %vm203 = vmand %vm159, %vm84
    %v204 = vsel %vm202, %v200, 0.0
    %v205 = vsel %vm203, %v201, 0.0
    %s206 = scalar_lea.vmem %s1, 64
    %v207 = vld [vmem:[%s206] sm:$0xff]
    %209 = vset.pattern.permute.xlu0 0
    %210 = vperm.xlu0 %209, %v207
    %v211 = vpop.permute.xlu0 %210
    %v213 = vmul.f32 %v211, %v204
    %v214 = vmul.f32 %v211, %v205
    %v215 = vadd.f32 %v193, %v213
    %v216 = vadd.f32 %v194, %v214
    %v217 = vadd.f32 %v215, %v216
    %218 = vadd.xlane.f32.xlu0 %v217
    %v219 = vpop.xlane.xlu0 %218
    %v220 = vmul.f32 %v215, %v215
    %v221 = vmul.f32 %v216, %v216
    %v222 = vadd.f32 %v220, %v221
    %223 = vadd.xlane.f32.xlu0 %v222
    %v224 = vpop.xlane.xlu0 %223
    %v225 = vld [vmem:[%s4] sm:$0xff]
    %vm226 = vcmask 64512
    %v228 = vsel %vm226, %v225, 0
    %230 = vmatpush.msra.mxu0 0.0
    %231 = vmatpush.msra.mxu0 0.0
    %232 = vmatpush.msra.mxu0 0.0
    %233 = vmatpush.msra.mxu0 0.0
    %234 = vmatpush.msra.mxu0 0.0
    %235 = vmatpush.msra.mxu0 0.0
    %236 = vmatpush.msra.mxu0 0.0
    %237 = vmatpush.msra.mxu0 0.0
    %238 = vmatpush.msra.mxu0 0.0
    %239 = vmatpush.msra.mxu0 0.0
    %240 = vmatpush.msra.mxu0 0.0
    %241 = vmatpush.msra.mxu0 0.0
    %242 = vmatpush.msra.mxu0 0.0
    %243 = vmatpush.msra.mxu0 0.0
    %244 = vmatpush.msra.mxu0 0.0
    %245 = vmatpush.msra.mxu0 %v219
    %246 = vmatmul.f32.gmra.mxu0 %v228
    %v247 = vpop.f32.mrf.mxu0
    %v248 = vadd.f32 0.0, %v247
    %249 = vdwg.mxu0
    %250 = vmatpush.msra.mxu0 0.0
    %251 = vmatpush.msra.mxu0 0.0
    %252 = vmatpush.msra.mxu0 0.0
    %253 = vmatpush.msra.mxu0 0.0
    %254 = vmatpush.msra.mxu0 0.0
    %255 = vmatpush.msra.mxu0 0.0
    %256 = vmatpush.msra.mxu0 0.0
    %257 = vmatpush.msra.mxu0 0.0
    %258 = vmatpush.msra.mxu0 0.0
    %259 = vmatpush.msra.mxu0 0.0
    %260 = vmatpush.msra.mxu0 0.0
    %261 = vmatpush.msra.mxu0 0.0
    %262 = vmatpush.msra.mxu0 0.0
    %263 = vmatpush.msra.mxu0 0.0
    %264 = vmatpush.msra.mxu0 0.0
    %265 = vmatpush.msra.mxu0 %v224
    %266 = vmatmul.f32.gmra.mxu0 %v228
    %v267 = vpop.f32.mrf.mxu0
    %v268 = vadd.f32 0.0, %v267
    %269 = vdwg.mxu0
    %v270 = vmul.f32 %v248, 0.001953125
    %v271 = vmul.f32 %v268, 0.001953125
    %v272 = vmul.f32 %v270, %v270
    %v273 = vsub.f32 %v271, %v272
    %v274 = vld [vmem:[%s2] sm:$0xff]
    %v275 = vadd.f32 %v273, 0.001
    %v276 = vrsqrt.pop %v275
    %v277 = vmul.f32 %v276, %v275
    %v278 = vmul.f32 %v277, %v276
    %v279 = vmul.f32 0.5, %v278
    %v280 = vsub.f32 1.5, %v279
    %v281 = vmul.f32 %v276, %v280
    %vm282 = vweird.f32 %v275
    %vm283 = vweird.f32 %v276
    %vm284 = vmor %vm282, %vm283
    %v285 = vsel %vm284, %v276, %v281
    %v286 = vmul.f32 %v274, %v285
    %v287 = vld [vmem:[%s3] sm:$0xff]
    %v288 = vmul.f32 %v270, %v286
    %v289 = vsub.f32 %v287, %v288
    %291 = vset.pattern.permute.xlu0 0
    %292 = vperm.xlu0 %291, %v286
    %v293 = vpop.permute.xlu0 %292
    %v295 = vmul.f32 %v215, %v293
    %v296 = vmul.f32 %v216, %v293
    %298 = vset.pattern.permute.xlu0 0
    %299 = vperm.xlu0 %298, %v289
    %v300 = vpop.permute.xlu0 %299
    %v302 = vadd.f32 %v295, %v300
    %v303 = vadd.f32 %v296, %v300
    %v304 = vmax.f32 %v302, 0.0
    %v305 = vmax.f32 %v303, 0.0
    %v306 = vld [vmem:[%s5] sm:$0xff]
    %v308 = vsel %vm226, %v306, 0
    %310 = vmatpush.msra.mxu0 0.0
    %311 = vmatpush.msra.mxu0 0.0
    %312 = vmatpush.msra.mxu0 0.0
    %313 = vmatpush.msra.mxu0 0.0
    %314 = vmatpush.msra.mxu0 0.0
    %315 = vmatpush.msra.mxu0 0.0
    %316 = vmatpush.msra.mxu0 0.0
    %317 = vmatpush.msra.mxu0 0.0
    %318 = vmatpush.msra.mxu0 0.0
    %319 = vmatpush.msra.mxu0 0.0
    %320 = vmatpush.msra.mxu0 0.0
    %321 = vmatpush.msra.mxu0 0.0
    %322 = vmatpush.msra.mxu0 0.0
    %323 = vmatpush.msra.mxu0 0.0
    %324 = vmatpush.msra.mxu0 0.0
    %325 = vmatpush.msra.mxu0 %v304
    %326 = vmatmul.f32.gmra.mxu0 %v308
    %v327 = vpop.f32.mrf.mxu0
    %v328 = vadd.f32 0.0, %v327
    %329 = vdwg.mxu0
    %330 = vmatpush.msra.mxu0 0.0
    %331 = vmatpush.msra.mxu0 0.0
    %332 = vmatpush.msra.mxu0 0.0
    %333 = vmatpush.msra.mxu0 0.0
    %334 = vmatpush.msra.mxu0 0.0
    %335 = vmatpush.msra.mxu0 0.0
    %336 = vmatpush.msra.mxu0 0.0
    %337 = vmatpush.msra.mxu0 0.0
    %338 = vmatpush.msra.mxu0 0.0
    %339 = vmatpush.msra.mxu0 0.0
    %340 = vmatpush.msra.mxu0 0.0
    %341 = vmatpush.msra.mxu0 0.0
    %342 = vmatpush.msra.mxu0 0.0
    %343 = vmatpush.msra.mxu0 0.0
    %344 = vmatpush.msra.mxu0 0.0
    %345 = vmatpush.msra.mxu0 %v305
    %346 = vmatmul.f32.gmra.mxu0 %v308
    %v347 = vpop.f32.mrf.mxu0
    %v348 = vadd.f32 0.0, %v347
    %349 = vdwg.mxu0
    %v350 = vmax.f32 %v328, 0.0
    %v351 = vmax.f32 %v348, 0.0
    %352 = vst [vmem:[#allocation2] sm:$0xff] %v350
    %353 = vst [vmem:[#allocation2 + $0x8] sm:$0xff] %v351
    // Predicated region
    $region26: #{tpu_custom_call.1} parent=1 // pred_check
      _
    $region27: #{tpu_custom_call.1} parent=1 // pred_check_branch
      %355 = sbr.rel (0) target = $region29
    $region28: #{tpu_custom_call.1} parent=1 // pred_region
      %357 = vsyncadd [#allocation3], 0
      %s359 = sshll.u32 [#allocation2], 4
      %s360 = int_to_ptr.vmem [resolvable:$true] %s359
      %s361 = sshll.u32 %s6, 4
      %s362 = int_to_ptr.hbm [resolvable:$true] %s361
      %364 = dma.vmem_to_hbm [thread:$0]  %s360, 256, %s362, [#allocation3]
    $region29: #{tpu_custom_call.1} parent=1 // pred_fallthru
      _
    // Predicated region
    $region30: #{tpu_custom_call.1} parent=1 // pred_check
      _
    $region31: #{tpu_custom_call.1} parent=1 // pred_check_branch
      %366 = sbr.rel (0) target = $region33
    $region32: #{tpu_custom_call.1} parent=1 // pred_region
      %368 = dma.done [#allocation3], 256
    $region33: #{tpu_custom_call.1} parent=1 // pred_fallthru
      _
    %369 = vsyncpa [#allocation3], 1

</llo_original>
